<compile_context>
chip_gen: v7x
topology: tpu7x:2x2x1
jax: 0.10.0
libtpu: 0.0.40
codegen_flags: <defaults>
</compile_context>

<pallas_src>
import math

import jax
import jax.numpy as jnp
import numpy as np
from jax.experimental import pallas as pl
from jax.experimental.pallas import tpu as pltpu


_INV_SQRT2 = 1.0 / math.sqrt(2.0)
_LANE = 128
_SUBLANE = 8


def _round_up(x, m):
    return ((x + m - 1) // m) * m


def _erf(x):
    # Abramowitz & Stegun 7.1.26 polynomial (max abs err ~1.5e-7).  Uses only
    # ops with guaranteed Mosaic lowerings; the exp goes to the EUP slot so it
    # is essentially free next to the MXU work.
    # TODO(synk): switch to lax.erf if/when its Mosaic lowering is confirmed on
    # all target generations; the polynomial is kept for guaranteed compilation.
    a1, a2, a3, a4, a5 = (0.254829592, -0.284496736, 1.421413741,
                          -1.453152027, 1.061405429)
    p = 0.3275911
    s = jnp.where(x >= 0.0, 1.0, -1.0)
    z = jnp.abs(x)
    t = 1.0 / (1.0 + p * z)
    poly = ((((a5 * t + a4) * t + a3) * t + a2) * t + a1) * t
    return s * (1.0 - poly * jnp.exp(-z * z))


def _gelu_exact(x):
    # Matches torch.nn.functional.gelu (approximate='none'): 0.5*x*(1+erf(x/sqrt2))
    return 0.5 * x * (1.0 + _erf(x * _INV_SQRT2))


def ffn_kernel(x_ref, w1_ref, b1_ref, w2_ref, b2_ref, o_ref, acc_ref):
    # Grid = (row tiles i, hidden tiles k).  Per step:
    #   h_k = gelu(x @ W1[:, k-chunk] + b1[k-chunk])        (f32)
    #   acc += h_k @ W2[k-chunk, :]                          (f32 accumulator)
    # Output written once, on the last hidden chunk.
    k = pl.program_id(1)

    @pl.when(k == 0)
    def _():
        acc_ref[...] = jnp.zeros_like(acc_ref)

    h = jnp.dot(x_ref[...], w1_ref[...],
                preferred_element_type=jnp.float32) + b1_ref[...]
    h = _gelu_exact(h)
    # TODO(synk): dropout is the identity in eval/inference mode; training-mode
    # dropout would apply pltpu.prng_seed + pltpu.stateful_bernoulli on `h` here.
    acc_ref[...] += jnp.dot(h.astype(w2_ref.dtype), w2_ref[...],
                            preferred_element_type=jnp.float32)

    @pl.when(k == pl.num_programs(1) - 1)
    def _():
        o_ref[...] = (acc_ref[...] + b2_ref[...]).astype(o_ref.dtype)


def prepare_ffn_params(params, *, matmul_dtype=jnp.bfloat16):
    """One-time parameter prep (hoisted out of the per-call path).

    Transposes the nn.Linear (out, in) weights into row-major matmul layout,
    casts them to the MXU operand dtype and zero-pads the hidden dim to a
    multiple of 128 so the hidden grid axis tiles exactly.  Zero padding is
    exact: gelu(0 + 0) = 0 and the padded W2 rows are zero.
    """
    hidden, d_in = params["w1"].shape
    hidden_p = _round_up(hidden, _LANE)
    pad_h = hidden_p - hidden

    w1 = jnp.pad(params["w1"].T.astype(matmul_dtype), ((0, 0), (0, pad_h)))
    w2 = jnp.pad(params["w2"].T.astype(matmul_dtype), ((0, pad_h), (0, 0)))
    b1 = jnp.pad(params["b1"].astype(jnp.float32), (0, pad_h)).reshape(1, hidden_p)
    b2 = params["b2"].astype(jnp.float32).reshape(1, d_in)
    return {"w1": w1, "b1": b1, "w2": w2, "b2": b2,
            "d_in": d_in, "hidden_p": hidden_p, "matmul_dtype": matmul_dtype}


def position_wise_ffn(x, prepared, *, tile_m=256, tile_hidden=512,
                      out_dtype=None):
    """x: (..., d_in).  Fused Linear -> GELU -> (eval) Dropout -> Linear."""
    d_in = prepared["d_in"]
    hidden_p = prepared["hidden_p"]
    mm_dtype = prepared["matmul_dtype"]
    w1, b1, w2, b2 = (prepared["w1"], prepared["b1"],
                      prepared["w2"], prepared["b2"])

    orig_shape = x.shape
    if out_dtype is None:
        out_dtype = x.dtype
    x2 = x.reshape(-1, d_in).astype(mm_dtype)
    M = x2.shape[0]

    # Row tile: multiple of 256 (v6e/v7x MXU width) when M is large enough,
    # otherwise one block rounded to the sublane quantum.  No host padding:
    # the grid uses cdiv and Pallas masks partial-row-block writes.
    tm = min(_round_up(tile_m, 256), _round_up(M, _SUBLANE))
    grid_m = pl.cdiv(M, tm)

    # Hidden tile: largest multiple of 128 that divides hidden_p and does not
    # exceed tile_hidden (always exists because hidden_p % 128 == 0).
    tn = max(_LANE, (min(tile_hidden, hidden_p) // _LANE) * _LANE)
    while hidden_p % tn:
        tn -= _LANE
    grid_k = hidden_p // tn

    mm_bytes = jnp.dtype(mm_dtype).itemsize
    out_bytes = jnp.dtype(out_dtype).itemsize
    vmem_est = (2 * tm * d_in * mm_bytes        # x tile (double-buffered)
                + 2 * d_in * tn * mm_bytes      # W1 chunk (double-buffered)
                + 2 * tn * d_in * mm_bytes      # W2 chunk (double-buffered)
                + 2 * tn * 4 + 2 * d_in * 4     # biases
                + 2 * tm * d_in * out_bytes     # output tile
                + tm * d_in * 4                 # f32 accumulator scratch
                + 2 * tm * tn * 4)              # in-kernel h intermediate
    # Cap at 64 MiB so the same plan fits a single v7x TensorCore.
    vmem_limit = int(min(max(int(vmem_est * 1.5), 16 * 2**20), 64 * 2**20))

    cost = pl.CostEstimate(
        flops=4 * M * d_in * hidden_p,
        transcendentals=M * hidden_p,
        bytes_accessed=(M * d_in * (mm_bytes + out_bytes)
                        + 2 * hidden_p * d_in * mm_bytes
                        + (hidden_p + d_in) * 4),
    )

    out = pl.pallas_call(
        ffn_kernel,
        out_shape=jax.ShapeDtypeStruct((M, d_in), out_dtype),
        grid=(grid_m, grid_k),
        in_specs=[
            pl.BlockSpec((tm, d_in), lambda i, k: (i, 0)),   # x rows
            pl.BlockSpec((d_in, tn), lambda i, k: (0, k)),   # W1 hidden chunk
            pl.BlockSpec((1, tn), lambda i, k: (0, k)),      # b1 chunk
            pl.BlockSpec((tn, d_in), lambda i, k: (k, 0)),   # W2 hidden chunk
            pl.BlockSpec((1, d_in), lambda i, k: (0, 0)),    # b2 (constant)
        ],
        out_specs=pl.BlockSpec((tm, d_in), lambda i, k: (i, 0)),
        scratch_shapes=[pltpu.VMEM((tm, d_in), jnp.float32)],
        compiler_params=pltpu.CompilerParams(
            dimension_semantics=("parallel", "arbitrary"),
            vmem_limit_bytes=vmem_limit),
        cost_estimate=cost,
    )(x2, w1, b1, w2, b2)

    return out.reshape(orig_shape)


def ffn_reference(x, params):
    """Pure-JAX reference mirroring the PyTorch forward (eval mode: dropout = id)."""
    h = jnp.dot(x, params["w1"].T) + params["b1"]
    h = jax.nn.gelu(h, approximate=False)
    return jnp.dot(h, params["w2"].T) + params["b2"]


if __name__ == "__main__":
    input_dim, hidden_dim = 128, 256

    key = jax.random.PRNGKey(0)
    k1, k2, k3, k4, k5, k6 = jax.random.split(key, 6)
    params = {
        # nn.Linear layout: weight (out_features, in_features), bias (out_features,)
        "w1": jax.random.normal(k1, (hidden_dim, input_dim), jnp.float32) / math.sqrt(input_dim),
        "b1": jax.random.normal(k2, (hidden_dim,), jnp.float32) * 0.1,
        "w2": jax.random.normal(k3, (input_dim, hidden_dim), jnp.float32) / math.sqrt(hidden_dim),
        "b2": jax.random.normal(k4, (input_dim,), jnp.float32) * 0.1,
    }

    # f32-operand path (only the test forces f32; production default is bf16).
    prep_f32 = prepare_ffn_params(params, matmul_dtype=jnp.float32)

    x = jax.random.normal(k5, (2, 8, input_dim), jnp.float32)
    out = jax.block_until_ready(position_wise_ffn(x, prep_f32))
    ref = jax.block_until_ready(ffn_reference(x, params))
    np.testing.assert_allclose(np.asarray(out), np.asarray(ref), rtol=2e-2, atol=2e-2)

    # Ragged row count: exercises the no-host-pad path (partial row block,
    # masked output writes).
    x_odd = jax.random.normal(k6, (3, 5, input_dim), jnp.float32)
    out_odd = jax.block_until_ready(position_wise_ffn(x_odd, prep_f32))
    ref_odd = jax.block_until_ready(ffn_reference(x_odd, params))
    np.testing.assert_allclose(np.asarray(out_odd), np.asarray(ref_odd),
                               rtol=2e-2, atol=2e-2)

    # Default bf16 operand / bf16 output path (production config): smoke test.
    prep_bf16 = prepare_ffn_params(params)   # matmul_dtype=jnp.bfloat16
    out_bf16 = jax.block_until_ready(
        position_wise_ffn(x, prep_bf16, out_dtype=jnp.bfloat16))
    assert out_bf16.shape == x.shape and out_bf16.dtype == jnp.bfloat16

    print("KERNEL_OK")
</pallas_src>

<mosaic_0001>
module attributes {stable_mosaic.version = 11 : i64} {
  func.func @ffn_kernel(%arg0: i32, %arg1: i32, %arg2: memref<16x128xf32, #tpu.memory_space<vmem>>, %arg3: memref<128x256xf32, #tpu.memory_space<vmem>>, %arg4: memref<1x256xf32, #tpu.memory_space<vmem>>, %arg5: memref<256x128xf32, #tpu.memory_space<vmem>>, %arg6: memref<1x128xf32, #tpu.memory_space<vmem>>, %arg7: memref<16x128xf32, #tpu.memory_space<vmem>>, %arg8: memref<16x128xf32, #tpu.memory_space<vmem>>) attributes {dimension_semantics = [#tpu.dimension_semantics<parallel>, #tpu.dimension_semantics<arbitrary>], iteration_bounds = array<i64: 1, 1>, scalar_prefetch = 0 : i64, scratch_operands = 1 : i64, tpu.core_type = #tpu.core_type<tc>, window_params = [{transform_indices = @transform_0, window_bounds = array<i64: 16, 128>}, {transform_indices = @transform_1, window_bounds = array<i64: 128, 256>}, {transform_indices = @transform_2, window_bounds = array<i64: 1, 256>}, {transform_indices = @transform_3, window_bounds = array<i64: 256, 128>}, {pipeline_mode = #tpu.pipeline_mode<synchronous>, transform_indices = @transform_4, window_bounds = array<i64: 1, 128>}, {transform_indices = @transform_5, window_bounds = array<i64: 16, 128>}]} {
    %c0_i32 = arith.constant 0 : i32
    %0 = arith.cmpi eq, %arg1, %c0_i32 : i32
    %1 = arith.extui %0 : i1 to i32
    %c0_i32_0 = arith.constant 0 : i32
    %2 = arith.cmpi ne, %1, %c0_i32_0 : i32
    scf.if %2 {
      %cst_31 = arith.constant 0.000000e+00 : f32
      %58 = vector.broadcast %cst_31 : f32 to vector<16x128xf32>
      %c0_32 = arith.constant 0 : index
      %c0_33 = arith.constant 0 : index
      %59 = vector.load %arg8[%c0_32, %c0_33] : memref<16x128xf32, #tpu.memory_space<vmem>>, vector<16x128xf32>
      tpu.vector_store %arg8[%c0_32, %c0_33], %58 {strides = array<i32>} : memref<16x128xf32, #tpu.memory_space<vmem>>, vector<16x128xf32>,
    } else {
    }
    %c0 = arith.constant 0 : index
    %c0_1 = arith.constant 0 : index
    %3 = vector.load %arg2[%c0, %c0_1] : memref<16x128xf32, #tpu.memory_space<vmem>>, vector<16x128xf32>
    %c0_2 = arith.constant 0 : index
    %c0_3 = arith.constant 0 : index
    %4 = vector.load %arg3[%c0_2, %c0_3] : memref<128x256xf32, #tpu.memory_space<vmem>>, vector<128x256xf32>
    %cst = arith.constant dense<0.000000e+00> : vector<16x256xf32>
    %5 = tpu.matmul %3, %4, %cst {dimension_numbers = #tpu.dot_dimension_numbers<[1], [0], [0], [1], [0, 0, 1, 1], [], []>} : vector<16x128xf32>, vector<128x256xf32>, vector<16x256xf32> -> vector<16x256xf32>
    %c0_4 = arith.constant 0 : index
    %c0_5 = arith.constant 0 : index
    %6 = vector.load %arg4[%c0_4, %c0_5] : memref<1x256xf32, #tpu.memory_space<vmem>>, vector<1x256xf32>
    %7 = vector.broadcast %6 : vector<1x256xf32> to vector<16x256xf32>
    %8 = arith.addf %5, %7 : vector<16x256xf32>
    %cst_6 = arith.constant 5.000000e-01 : f32
    %9 = vector.broadcast %cst_6 : f32 to vector<16x256xf32>
    %10 = arith.mulf %9, %8 : vector<16x256xf32>
    %cst_7 = arith.constant 0.707106769 : f32
    %11 = vector.broadcast %cst_7 : f32 to vector<16x256xf32>
    %12 = arith.mulf %8, %11 : vector<16x256xf32>
    %cst_8 = arith.constant 0.000000e+00 : f32
    %13 = vector.broadcast %cst_8 : f32 to vector<16x256xf32>
    %14 = arith.cmpf oge, %12, %13 : vector<16x256xf32>
    %cst_9 = arith.constant 1.000000e+00 : f32
    %cst_10 = arith.constant -1.000000e+00 : f32
    %15 = vector.broadcast %cst_9 : f32 to vector<16x256xf32>
    %16 = vector.broadcast %cst_10 : f32 to vector<16x256xf32>
    %17 = arith.select %14, %15, %16 : vector<16x256xi1>, vector<16x256xf32>
    %18 = math.absf %12 : vector<16x256xf32>
    %cst_11 = arith.constant 0.327591091 : f32
    %19 = vector.broadcast %cst_11 : f32 to vector<16x256xf32>
    %20 = arith.mulf %19, %18 : vector<16x256xf32>
    %cst_12 = arith.constant 1.000000e+00 : f32
    %21 = vector.broadcast %cst_12 : f32 to vector<16x256xf32>
    %22 = arith.addf %21, %20 : vector<16x256xf32>
    %cst_13 = arith.constant 1.000000e+00 : f32
    %23 = vector.broadcast %cst_13 : f32 to vector<16x256xf32>
    %24 = arith.divf %23, %22 : vector<16x256xf32>
    %cst_14 = arith.constant 1.06140542 : f32
    %25 = vector.broadcast %cst_14 : f32 to vector<16x256xf32>
    %26 = arith.mulf %25, %24 : vector<16x256xf32>
    %cst_15 = arith.constant -1.45315206 : f32
    %27 = vector.broadcast %cst_15 : f32 to vector<16x256xf32>
    %28 = arith.addf %26, %27 : vector<16x256xf32>
    %29 = arith.mulf %28, %24 : vector<16x256xf32>
    %cst_16 = arith.constant 1.42141378 : f32
    %30 = vector.broadcast %cst_16 : f32 to vector<16x256xf32>
    %31 = arith.addf %29, %30 : vector<16x256xf32>
    %32 = arith.mulf %31, %24 : vector<16x256xf32>
    %cst_17 = arith.constant -0.284496725 : f32
    %33 = vector.broadcast %cst_17 : f32 to vector<16x256xf32>
    %34 = arith.addf %32, %33 : vector<16x256xf32>
    %35 = arith.mulf %34, %24 : vector<16x256xf32>
    %cst_18 = arith.constant 0.254829586 : f32
    %36 = vector.broadcast %cst_18 : f32 to vector<16x256xf32>
    %37 = arith.addf %35, %36 : vector<16x256xf32>
    %38 = arith.mulf %37, %24 : vector<16x256xf32>
    %cst_19 = arith.constant 0.000000e+00 : f32
    %39 = vector.broadcast %cst_19 : f32 to vector<16x256xf32>
    %40 = arith.subf %39, %18 : vector<16x256xf32>
    %41 = arith.mulf %40, %18 : vector<16x256xf32>
    %42 = math.exp %41 : vector<16x256xf32>
    %43 = arith.mulf %38, %42 : vector<16x256xf32>
    %cst_20 = arith.constant 1.000000e+00 : f32
    %44 = vector.broadcast %cst_20 : f32 to vector<16x256xf32>
    %45 = arith.subf %44, %43 : vector<16x256xf32>
    %46 = arith.mulf %17, %45 : vector<16x256xf32>
    %cst_21 = arith.constant 1.000000e+00 : f32
    %47 = vector.broadcast %cst_21 : f32 to vector<16x256xf32>
    %48 = arith.addf %47, %46 : vector<16x256xf32>
    %49 = arith.mulf %10, %48 : vector<16x256xf32>
    %c0_22 = arith.constant 0 : index
    %c0_23 = arith.constant 0 : index
    %50 = vector.load %arg8[%c0_22, %c0_23] : memref<16x128xf32, #tpu.memory_space<vmem>>, vector<16x128xf32>
    %c0_24 = arith.constant 0 : index
    %c0_25 = arith.constant 0 : index
    %51 = vector.load %arg5[%c0_24, %c0_25] : memref<256x128xf32, #tpu.memory_space<vmem>>, vector<256x128xf32>
    %cst_26 = arith.constant dense<0.000000e+00> : vector<16x128xf32>
    %52 = tpu.matmul %49, %51, %cst_26 {dimension_numbers = #tpu.dot_dimension_numbers<[1], [0], [0], [1], [0, 0, 1, 1], [], []>} : vector<16x256xf32>, vector<256x128xf32>, vector<16x128xf32> -> vector<16x128xf32>
    %53 = arith.addf %50, %52 : vector<16x128xf32>
    %c0_27 = arith.constant 0 : index
    %c0_28 = arith.constant 0 : index
    %54 = vector.load %arg8[%c0_27, %c0_28] : memref<16x128xf32, #tpu.memory_space<vmem>>, vector<16x128xf32>
    tpu.vector_store %arg8[%c0_27, %c0_28], %53 {strides = array<i32>} : memref<16x128xf32, #tpu.memory_space<vmem>>, vector<16x128xf32>,
    %c0_i32_29 = arith.constant 0 : i32
    %55 = arith.cmpi eq, %arg1, %c0_i32_29 : i32
    %56 = arith.extui %55 : i1 to i32
    %c0_i32_30 = arith.constant 0 : i32
    %57 = arith.cmpi ne, %56, %c0_i32_30 : i32
    scf.if %57 {
      %c0_31 = arith.constant 0 : index
      %c0_32 = arith.constant 0 : index
      %58 = vector.load %arg8[%c0_31, %c0_32] : memref<16x128xf32, #tpu.memory_space<vmem>>, vector<16x128xf32>
      %c0_33 = arith.constant 0 : index
      %c0_34 = arith.constant 0 : index
      %59 = vector.load %arg6[%c0_33, %c0_34] : memref<1x128xf32, #tpu.memory_space<vmem>>, vector<1x128xf32>
      %60 = vector.broadcast %59 : vector<1x128xf32> to vector<16x128xf32>
      %61 = arith.addf %58, %60 : vector<16x128xf32>
      %c0_35 = arith.constant 0 : index
      %c0_36 = arith.constant 0 : index
      %62 = vector.load %arg7[%c0_35, %c0_36] : memref<16x128xf32, #tpu.memory_space<vmem>>, vector<16x128xf32>
      tpu.vector_store %arg7[%c0_35, %c0_36], %61 {strides = array<i32>} : memref<16x128xf32, #tpu.memory_space<vmem>>, vector<16x128xf32>,
    } else {
    }
    return
  }
  func.func @transform_0(%arg0: i32, %arg1: i32) -> (i32, i32) {
    %c0_i32 = arith.constant 0 : i32
    %c0_i32_0 = arith.constant 0 : i32
    return %arg0, %c0_i32 : i32, i32
  }
  func.func @transform_1(%arg0: i32, %arg1: i32) -> (i32, i32) {
    %c0_i32 = arith.constant 0 : i32
    %c0_i32_0 = arith.constant 0 : i32
    return %c0_i32, %arg1 : i32, i32
  }
  func.func @transform_2(%arg0: i32, %arg1: i32) -> (i32, i32) {
    %c0_i32 = arith.constant 0 : i32
    %c0_i32_0 = arith.constant 0 : i32
    return %c0_i32, %arg1 : i32, i32
  }
  func.func @transform_3(%arg0: i32, %arg1: i32) -> (i32, i32) {
    %c0_i32 = arith.constant 0 : i32
    %c0_i32_0 = arith.constant 0 : i32
    return %arg1, %c0_i32 : i32, i32
  }
  func.func @transform_4(%arg0: i32, %arg1: i32) -> (i32, i32) {
    %c0_i32 = arith.constant 0 : i32
    %c0_i32_0 = arith.constant 0 : i32
    %c0_i32_1 = arith.constant 0 : i32
    return %c0_i32, %c0_i32_0 : i32, i32
  }
  func.func @transform_5(%arg0: i32, %arg1: i32) -> (i32, i32) {
    %c0_i32 = arith.constant 0 : i32
    %c0_i32_0 = arith.constant 0 : i32
    return %arg0, %c0_i32 : i32, i32
  }
}

</mosaic_0001>

<llo_original>
// kernel: tpu_custom_call.1
$region0: #{tpu_custom_call.1}
  #allocation0 [shape = 'u32[]', space=smem, size = 0x4, offset = 0x4, fixed_abs, tag = 'smem constant byte address 0x4 - core index']
  #allocation1 [shape = 'u32[144,128]{1,0:T(1,128)}', space=vmem, size = 0x12000, scoped, tag = 'internal scratch']
  #allocation2 [shape = 'f32[16,128]{1,0:T(8,128)}', space=vmem, size = 0x2000, scoped, tag = 'scratch operand']
  %s0 = inlined_call_operand.hbm [shape: f32[16,128], index: 0, kind: input, shape index: {}]
  %s1 = inlined_call_operand.hbm [shape: f32[128,256], index: 1, kind: input, shape index: {}]
  %s2 = inlined_call_operand.vmem [shape: f32[1,256], index: 2, kind: input, shape index: {}]
  %s3 = inlined_call_operand.hbm [shape: f32[256,128], index: 3, kind: input, shape index: {}]
  %s4 = inlined_call_operand.vmem [shape: f32[1,128], index: 4, kind: input, shape index: {}]
  %s5 = inlined_call_operand.hbm [shape: f32[16,128], index: 5, kind: output, shape index: {}]
  %s6 = sld [smem:[#allocation0]]
  $region50: #{tpu_custom_call.1} parent=0
    _
  %s8 = ssub.s32 1, %s6
  %s9 = scalar_select 0, %s8, %s6
  $region1: #{tpu_custom_call.1} parent=0
    #allocation3 [shape = 'u8[8192]{0}', space=vmem, size = 0x2000, scoped, tag = 'input window, operand 0, single buffered']
    #allocation4 [shape = 's32[1]{0}', space=sflag, size = 0x4, scoped, tag = 'scoped memory for tpu_custom_call.1']
    #allocation5 [shape = 's32[1]{0}', space=sflag, size = 0x4, scoped, tag = 'scoped memory for tpu_custom_call.1']
    #allocation6 [shape = 'u8[131072]{0}', space=vmem, size = 0x20000, scoped, tag = 'input window, operand 1, single buffered']
    #allocation7 [shape = 's32[1]{0}', space=sflag, size = 0x4, scoped, tag = 'scoped memory for tpu_custom_call.1']
    #allocation8 [shape = 'u8[131072]{0}', space=vmem, size = 0x20000, scoped, tag = 'input window, operand 3, single buffered']
    #allocation9 [shape = 'u8[8192]{0}', space=vmem, size = 0x2000, scoped, tag = 'output window, operand 0, single buffered']
    %10 = vsyncpa [#allocation4], 0
    %11 = vsyncpa [#allocation7], 0
    %12 = vsyncpa [#allocation5], 0
    // Predicated region
    $region2: #{tpu_custom_call.1} parent=1 // pred_check
      _
    $region3: #{tpu_custom_call.1} parent=1 // pred_check_branch
      %14 = sbr.rel (0) target = $region5
    $region4: #{tpu_custom_call.1} parent=1 // pred_region
      %s16 = ssub.s32 256, 256
      %17 = vsyncadd [#allocation4], %s16
      %s18 = sshll.u32 [#allocation3], 4
      %s19 = int_to_ptr.vmem [resolvable:$true] %s18
      %24 = dma.hbm_to_vmem [thread:$0]  %s0, 256, %s19, [#allocation4], 128, 128, 8
    $region5: #{tpu_custom_call.1} parent=1 // pred_fallthru
      _
    // Predicated region
    $region6: #{tpu_custom_call.1} parent=1 // pred_check
      _
    $region7: #{tpu_custom_call.1} parent=1 // pred_check_branch
      %26 = sbr.rel (0) target = $region9
    $region8: #{tpu_custom_call.1} parent=1 // pred_region
      %s28 = ssub.s32 4096, 4096
      %29 = vsyncadd [#allocation7], %s28
      %s30 = sshll.u32 [#allocation6], 4
      %s31 = int_to_ptr.vmem [resolvable:$true] %s30
      %36 = dma.hbm_to_vmem [thread:$0]  %s1, 4096, %s31, [#allocation7], 256, 256, 16
    $region9: #{tpu_custom_call.1} parent=1 // pred_fallthru
      _
    // Predicated region
    $region10: #{tpu_custom_call.1} parent=1 // pred_check
      _
    $region11: #{tpu_custom_call.1} parent=1 // pred_check_branch
      %38 = sbr.rel (0) target = $region13
    $region12: #{tpu_custom_call.1} parent=1 // pred_region
      _
    $region13: #{tpu_custom_call.1} parent=1 // pred_fallthru
      _
    // Predicated region
    $region14: #{tpu_custom_call.1} parent=1 // pred_check
      _
    $region15: #{tpu_custom_call.1} parent=1 // pred_check_branch
      %40 = sbr.rel (0) target = $region17
    $region16: #{tpu_custom_call.1} parent=1 // pred_region
      %s42 = ssub.s32 4096, 4096
      %43 = vsyncadd [#allocation7], %s42
      %s44 = sshll.u32 [#allocation8], 4
      %s45 = int_to_ptr.vmem [resolvable:$true] %s44
      %50 = dma.hbm_to_vmem [thread:$0]  %s3, 4096, %s45, [#allocation7], 128, 128, 8
    $region17: #{tpu_custom_call.1} parent=1 // pred_fallthru
      _
    // Predicated region
    $region18: #{tpu_custom_call.1} parent=1 // pred_check
      _
    $region19: #{tpu_custom_call.1} parent=1 // pred_check_branch
      %52 = sbr.rel (0) target = $region21
    $region20: #{tpu_custom_call.1} parent=1 // pred_region
      _
    $region21: #{tpu_custom_call.1} parent=1 // pred_fallthru
      _
    // Predicated region
    $region22: #{tpu_custom_call.1} parent=1 // pred_check
      _
    $region23: #{tpu_custom_call.1} parent=1 // pred_check_branch
      %54 = sbr.rel (0) target = $region25
    $region24: #{tpu_custom_call.1} parent=1 // pred_region
      %55 = dma.done [#allocation4], 256
    $region25: #{tpu_custom_call.1} parent=1 // pred_fallthru
      _
    // Predicated region
    $region26: #{tpu_custom_call.1} parent=1 // pred_check
      _
    $region27: #{tpu_custom_call.1} parent=1 // pred_check_branch
      %57 = sbr.rel (0) target = $region29
    $region28: #{tpu_custom_call.1} parent=1 // pred_region
      %58 = dma.done [#allocation7], 4096
    $region29: #{tpu_custom_call.1} parent=1 // pred_fallthru
      _
    // Predicated region
    $region30: #{tpu_custom_call.1} parent=1 // pred_check
      _
    $region31: #{tpu_custom_call.1} parent=1 // pred_check_branch
      %60 = sbr.rel (0) target = $region33
    $region32: #{tpu_custom_call.1} parent=1 // pred_region
      %61 = dma.done [#allocation7], 4096
    $region33: #{tpu_custom_call.1} parent=1 // pred_fallthru
      _
    %p62 = scmp.eq.s32.totalorder 0, 0
    // Predicated region
    $region34: #{tpu_custom_call.1} parent=1 // pred_check
      %p63 = pneg %p62
    $region35: #{tpu_custom_call.1} parent=1 // pred_check_branch
      %65 = sbr.rel (%p63) target = $region37
    $region36: #{tpu_custom_call.1} parent=1 // pred_region
      %66 = vst [vmem:[#allocation2] sm:$0xff] 0.0
      %67 = vst [vmem:[#allocation2 + $0x8] sm:$0xff] 0.0
    $region37: #{tpu_custom_call.1} parent=1 // pred_fallthru
      _
    %v68 = vld [vmem:[#allocation3] sm:$0xff]
    %v69 = vld [vmem:[#allocation3 + $0x8] sm:$0xff]
    %v70 = vld [vmem:[#allocation6] sm:$0xff]
    %v71 = vld [vmem:[#allocation6 + $0x8] sm:$0xff]
    %v72 = vld [vmem:[#allocation6 + $0x10] sm:$0xff]
    %v73 = vld [vmem:[#allocation6 + $0x18] sm:$0xff]
    %v74 = vld [vmem:[#allocation6 + $0x20] sm:$0xff]
    %v75 = vld [vmem:[#allocation6 + $0x28] sm:$0xff]
    %v76 = vld [vmem:[#allocation6 + $0x30] sm:$0xff]
    %v77 = vld [vmem:[#allocation6 + $0x38] sm:$0xff]
    %v78 = vld [vmem:[#allocation6 + $0x40] sm:$0xff]
    %v79 = vld [vmem:[#allocation6 + $0x48] sm:$0xff]
    %v80 = vld [vmem:[#allocation6 + $0x50] sm:$0xff]
    %v81 = vld [vmem:[#allocation6 + $0x58] sm:$0xff]
    %v82 = vld [vmem:[#allocation6 + $0x60] sm:$0xff]
    %v83 = vld [vmem:[#allocation6 + $0x68] sm:$0xff]
    %v84 = vld [vmem:[#allocation6 + $0x70] sm:$0xff]
    %v85 = vld [vmem:[#allocation6 + $0x78] sm:$0xff]
    %v86 = vld [vmem:[#allocation6 + $0x80] sm:$0xff]
    %v87 = vld [vmem:[#allocation6 + $0x88] sm:$0xff]
    %v88 = vld [vmem:[#allocation6 + $0x90] sm:$0xff]
    %v89 = vld [vmem:[#allocation6 + $0x98] sm:$0xff]
    %v90 = vld [vmem:[#allocation6 + $0xa0] sm:$0xff]
    %v91 = vld [vmem:[#allocation6 + $0xa8] sm:$0xff]
    %v92 = vld [vmem:[#allocation6 + $0xb0] sm:$0xff]
    %v93 = vld [vmem:[#allocation6 + $0xb8] sm:$0xff]
    %v94 = vld [vmem:[#allocation6 + $0xc0] sm:$0xff]
    %v95 = vld [vmem:[#allocation6 + $0xc8] sm:$0xff]
    %v96 = vld [vmem:[#allocation6 + $0xd0] sm:$0xff]
    %v97 = vld [vmem:[#allocation6 + $0xd8] sm:$0xff]
    %v98 = vld [vmem:[#allocation6 + $0xe0] sm:$0xff]
    %v99 = vld [vmem:[#allocation6 + $0xe8] sm:$0xff]
    %v100 = vld [vmem:[#allocation6 + $0xf0] sm:$0xff]
    %v101 = vld [vmem:[#allocation6 + $0xf8] sm:$0xff]
    %v102 = vld [vmem:[%s2] sm:$0x3]
    %v104 = vlaneseq
    %v105 = vshrl.u32 %v104, 7
    %v106 = vsub.s32 0, %v105
    %v107 = vrot.slane %v102, %v106
    %v108 = vlaneseq
    %v109 = vshrl.u32 %v108, 7
    %v110 = vsub.s32 1, %v109
    %v111 = vrot.slane %v102, %v110
    %114 = vmatprep.subr.mxu0 %v71
    %115 = vmatpush1.msra.mxu0 %v70
    %116 = vmatprep.subr.mxu0 %v73
    %117 = vmatpush1.msra.mxu0 %v72
    %118 = vmatprep.subr.mxu0 %v75
    %119 = vmatpush1.msra.mxu0 %v74
    %120 = vmatprep.subr.mxu0 %v77
    %121 = vmatpush1.msra.mxu0 %v76
    %122 = vmatprep.subr.mxu0 %v79
    %123 = vmatpush1.msra.mxu0 %v78
    %124 = vmatprep.subr.mxu0 %v81
    %125 = vmatpush1.msra.mxu0 %v80
    %126 = vmatprep.subr.mxu0 %v83
    %127 = vmatpush1.msra.mxu0 %v82
    %128 = vmatprep.subr.mxu0 %v85
    %129 = vmatpush1.msra.mxu0 %v84
    %130 = vmatprep.subr.mxu0 %v87
    %131 = vmatpush1.msra.mxu0 %v86
    %132 = vmatprep.subr.mxu0 %v89
    %133 = vmatpush1.msra.mxu0 %v88
    %134 = vmatprep.subr.mxu0 %v91
    %135 = vmatpush1.msra.mxu0 %v90
    %136 = vmatprep.subr.mxu0 %v93
    %137 = vmatpush1.msra.mxu0 %v92
    %138 = vmatprep.subr.mxu0 %v95
    %139 = vmatpush1.msra.mxu0 %v94
    %140 = vmatprep.subr.mxu0 %v97
    %141 = vmatpush1.msra.mxu0 %v96
    %142 = vmatprep.subr.mxu0 %v99
    %143 = vmatpush1.msra.mxu0 %v98
    %144 = vmatprep.subr.mxu0 %v101
    %145 = vmatpush1.msra.mxu0 %v100
    %146 = vmatprep.subr.mxu0 0.0
    %147 = vmatpush1.msra.mxu0 0.0
    %148 = vmatprep.subr.mxu0 0.0
    %149 = vmatpush1.msra.mxu0 0.0
    %150 = vmatprep.subr.mxu0 0.0
    %151 = vmatpush1.msra.mxu0 0.0
    %152 = vmatprep.subr.mxu0 0.0
    %153 = vmatpush1.msra.mxu0 0.0
    %154 = vmatprep.subr.mxu0 0.0
    %155 = vmatpush1.msra.mxu0 0.0
    %156 = vmatprep.subr.mxu0 0.0
    %157 = vmatpush1.msra.mxu0 0.0
    %158 = vmatprep.subr.mxu0 0.0
    %159 = vmatpush1.msra.mxu0 0.0
    %160 = vmatprep.subr.mxu0 0.0
    %161 = vmatpush1.msra.mxu0 0.0
    %162 = vmatprep.subr.mxu0 0.0
    %163 = vmatpush1.msra.mxu0 0.0
    %164 = vmatprep.subr.mxu0 0.0
    %165 = vmatpush1.msra.mxu0 0.0
    %166 = vmatprep.subr.mxu0 0.0
    %167 = vmatpush1.msra.mxu0 0.0
    %168 = vmatprep.subr.mxu0 0.0
    %169 = vmatpush1.msra.mxu0 0.0
    %170 = vmatprep.subr.mxu0 0.0
    %171 = vmatpush1.msra.mxu0 0.0
    %172 = vmatprep.subr.mxu0 0.0
    %173 = vmatpush1.msra.mxu0 0.0
    %174 = vmatprep.subr.mxu0 0.0
    %175 = vmatpush1.msra.mxu0 0.0
    %176 = vmatprep.subr.mxu0 0.0
    %177 = vmatpush1.msra.mxu0 0.0
    %178 = vmatprep.mubr.f32.mxu0 0.0
    %179 = vmatmul.mubr.f32.gmra.mrb[0].mxu0 %v68
    %v180 = vpop.f32.mrb[0].mxu0
    %v181 = vadd.f32 %v107, %v180
    %v182 = vpop.f32.mrb[0].mxu0
    %v183 = vadd.f32 %v111, %v182
    %184 = vmatprep.mubr.f32.mxu0 0.0
    %185 = vmatmul.mubr.f32.gmra.mrb[0].mxu0 %v69
    %v186 = vpop.f32.mrb[0].mxu0
    %v187 = vadd.f32 %v107, %v186
    %v188 = vpop.f32.mrb[0].mxu0
    %v189 = vadd.f32 %v111, %v188
    %190 = vdwg.mxu0
    %v191 = vmul.f32 %v181, 0.5
    %v192 = vmul.f32 %v183, 0.5
    %v193 = vmul.f32 %v187, 0.5
    %v194 = vmul.f32 %v189, 0.5
    %v195 = vmul.f32 %v181, 0.70710677
    %v196 = vmul.f32 %v183, 0.70710677
    %v197 = vmul.f32 %v187, 0.70710677
    %v198 = vmul.f32 %v189, 0.70710677
    %vm199 = vcmp.ge.f32.partialorder %v195, 0.0
    %vm200 = vcmp.ge.f32.partialorder %v196, 0.0
    %vm201 = vcmp.ge.f32.partialorder %v197, 0.0
    %vm202 = vcmp.ge.f32.partialorder %v198, 0.0
    %v203 = vsel %vm199, 1.0, -1.0
    %v204 = vsel %vm200, 1.0, -1.0
    %v205 = vsel %vm201, 1.0, -1.0
    %v206 = vsel %vm202, 1.0, -1.0
    %v207 = vand.u32 2147483647, %v195
    %v208 = vand.u32 2147483647, %v196
    %v209 = vand.u32 2147483647, %v197
    %v210 = vand.u32 2147483647, %v198
    %v211 = vmul.f32 %v207, 0.3275911
    %v212 = vmul.f32 %v208, 0.3275911
    %v213 = vmul.f32 %v209, 0.3275911
    %v214 = vmul.f32 %v210, 0.3275911
    %v215 = vadd.f32 %v211, 1.0
    %v216 = vadd.f32 %v212, 1.0
    %v217 = vadd.f32 %v213, 1.0
    %v218 = vadd.f32 %v214, 1.0
    %v219 = vrcp.pop %v215
    %v220 = vmul.f32 1.0, %v219
    %v221 = vrcp.pop %v216
    %v222 = vmul.f32 1.0, %v221
    %v223 = vrcp.pop %v217
    %v224 = vmul.f32 1.0, %v223
    %v225 = vrcp.pop %v218
    %v226 = vmul.f32 1.0, %v225
    %v227 = vmul.f32 %v220, 1.0614054
    %v228 = vmul.f32 %v222, 1.0614054
    %v229 = vmul.f32 %v224, 1.0614054
    %v230 = vmul.f32 %v226, 1.0614054
    %v231 = vadd.f32 %v227, -1.4531521
    %v232 = vadd.f32 %v228, -1.4531521
    %v233 = vadd.f32 %v229, -1.4531521
    %v234 = vadd.f32 %v230, -1.4531521
    %v235 = vmul.f32 %v231, %v220
    %v236 = vmul.f32 %v232, %v222
    %v237 = vmul.f32 %v233, %v224
    %v238 = vmul.f32 %v234, %v226
    %v239 = vadd.f32 %v235, 1.4214138
    %v240 = vadd.f32 %v236, 1.4214138
    %v241 = vadd.f32 %v237, 1.4214138
    %v242 = vadd.f32 %v238, 1.4214138
    %v243 = vmul.f32 %v239, %v220
    %v244 = vmul.f32 %v240, %v222
    %v245 = vmul.f32 %v241, %v224
    %v246 = vmul.f32 %v242, %v226
    %v247 = vadd.f32 %v243, -0.28449672
    %v248 = vadd.f32 %v244, -0.28449672
    %v249 = vadd.f32 %v245, -0.28449672
    %v250 = vadd.f32 %v246, -0.28449672
    %v251 = vmul.f32 %v247, %v220
    %v252 = vmul.f32 %v248, %v222
    %v253 = vmul.f32 %v249, %v224
    %v254 = vmul.f32 %v250, %v226
    %v255 = vadd.f32 %v251, 0.2548296
    %v256 = vadd.f32 %v252, 0.2548296
    %v257 = vadd.f32 %v253, 0.2548296
    %v258 = vadd.f32 %v254, 0.2548296
    %v259 = vmul.f32 %v255, %v220
    %v260 = vmul.f32 %v256, %v222
    %v261 = vmul.f32 %v257, %v224
    %v262 = vmul.f32 %v258, %v226
    %v263 = vsub.f32 0.0, %v207
    %v264 = vsub.f32 0.0, %v208
    %v265 = vsub.f32 0.0, %v209
    %v266 = vsub.f32 0.0, %v210
    %v267 = vmul.f32 %v263, %v207
    %v268 = vmul.f32 %v264, %v208
    %v269 = vmul.f32 %v265, %v209
    %v270 = vmul.f32 %v266, %v210
    %v271 = vmul.f32 %v267, 1.442695
    %v272 = vpow.pop %v271
    %v273 = vmul.f32 %v268, 1.442695
    %v274 = vpow.pop %v273
    %v275 = vmul.f32 %v269, 1.442695
    %v276 = vpow.pop %v275
    %v277 = vmul.f32 %v270, 1.442695
    %v278 = vpow.pop %v277
    %v279 = vmul.f32 %v259, %v272
    %v280 = vmul.f32 %v260, %v274
    %v281 = vmul.f32 %v261, %v276
    %v282 = vmul.f32 %v262, %v278
    %v283 = vsub.f32 1.0, %v279
    %v284 = vsub.f32 1.0, %v280
    %v285 = vsub.f32 1.0, %v281
    %v286 = vsub.f32 1.0, %v282
    %v287 = vmul.f32 %v203, %v283
    %v288 = vmul.f32 %v204, %v284
    %v289 = vmul.f32 %v205, %v285
    %v290 = vmul.f32 %v206, %v286
    %v291 = vadd.f32 %v287, 1.0
    %v292 = vadd.f32 %v288, 1.0
    %v293 = vadd.f32 %v289, 1.0
    %v294 = vadd.f32 %v290, 1.0
    %v295 = vmul.f32 %v191, %v291
    %v296 = vmul.f32 %v192, %v292
    %v297 = vmul.f32 %v193, %v293
    %v298 = vmul.f32 %v194, %v294
    %v299 = vld [vmem:[#allocation2] sm:$0xff]
    %v300 = vld [vmem:[#allocation2 + $0x8] sm:$0xff]
    %v301 = vld [vmem:[#allocation8] sm:$0xff]
    %v302 = vld [vmem:[#allocation8 + $0x8] sm:$0xff]
    %v303 = vld [vmem:[#allocation8 + $0x10] sm:$0xff]
    %v304 = vld [vmem:[#allocation8 + $0x18] sm:$0xff]
    %v305 = vld [vmem:[#allocation8 + $0x20] sm:$0xff]
    %v306 = vld [vmem:[#allocation8 + $0x28] sm:$0xff]
    %v307 = vld [vmem:[#allocation8 + $0x30] sm:$0xff]
    %v308 = vld [vmem:[#allocation8 + $0x38] sm:$0xff]
    %v309 = vld [vmem:[#allocation8 + $0x40] sm:$0xff]
    %v310 = vld [vmem:[#allocation8 + $0x48] sm:$0xff]
    %v311 = vld [vmem:[#allocation8 + $0x50] sm:$0xff]
    %v312 = vld [vmem:[#allocation8 + $0x58] sm:$0xff]
    %v313 = vld [vmem:[#allocation8 + $0x60] sm:$0xff]
    %v314 = vld [vmem:[#allocation8 + $0x68] sm:$0xff]
    %v315 = vld [vmem:[#allocation8 + $0x70] sm:$0xff]
    %v316 = vld [vmem:[#allocation8 + $0x78] sm:$0xff]
    %v317 = vld [vmem:[#allocation8 + $0x80] sm:$0xff]
    %v318 = vld [vmem:[#allocation8 + $0x88] sm:$0xff]
    %v319 = vld [vmem:[#allocation8 + $0x90] sm:$0xff]
    %v320 = vld [vmem:[#allocation8 + $0x98] sm:$0xff]
    %v321 = vld [vmem:[#allocation8 + $0xa0] sm:$0xff]
    %v322 = vld [vmem:[#allocation8 + $0xa8] sm:$0xff]
    %v323 = vld [vmem:[#allocation8 + $0xb0] sm:$0xff]
    %v324 = vld [vmem:[#allocation8 + $0xb8] sm:$0xff]
    %v325 = vld [vmem:[#allocation8 + $0xc0] sm:$0xff]
    %v326 = vld [vmem:[#allocation8 + $0xc8] sm:$0xff]
    %v327 = vld [vmem:[#allocation8 + $0xd0] sm:$0xff]
    %v328 = vld [vmem:[#allocation8 + $0xd8] sm:$0xff]
    %v329 = vld [vmem:[#allocation8 + $0xe0] sm:$0xff]
    %v330 = vld [vmem:[#allocation8 + $0xe8] sm:$0xff]
    %v331 = vld [vmem:[#allocation8 + $0xf0] sm:$0xff]
    %v332 = vld [vmem:[#allocation8 + $0xf8] sm:$0xff]
    %333 = vmatprep.subr.mxu0 0.0
    %334 = vmatpush1.msra.mxu0 %v301
    %335 = vmatprep.subr.mxu0 0.0
    %336 = vmatpush1.msra.mxu0 %v302
    %337 = vmatprep.subr.mxu0 0.0
    %338 = vmatpush1.msra.mxu0 %v303
    %339 = vmatprep.subr.mxu0 0.0
    %340 = vmatpush1.msra.mxu0 %v304
    %341 = vmatprep.subr.mxu0 0.0
    %342 = vmatpush1.msra.mxu0 %v305
    %343 = vmatprep.subr.mxu0 0.0
    %344 = vmatpush1.msra.mxu0 %v306
    %345 = vmatprep.subr.mxu0 0.0
    %346 = vmatpush1.msra.mxu0 %v307
    %347 = vmatprep.subr.mxu0 0.0
    %348 = vmatpush1.msra.mxu0 %v308
    %349 = vmatprep.subr.mxu0 0.0
    %350 = vmatpush1.msra.mxu0 %v309
    %351 = vmatprep.subr.mxu0 0.0
    %352 = vmatpush1.msra.mxu0 %v310
    %353 = vmatprep.subr.mxu0 0.0
    %354 = vmatpush1.msra.mxu0 %v311
    %355 = vmatprep.subr.mxu0 0.0
    %356 = vmatpush1.msra.mxu0 %v312
    %357 = vmatprep.subr.mxu0 0.0
    %358 = vmatpush1.msra.mxu0 %v313
    %359 = vmatprep.subr.mxu0 0.0
    %360 = vmatpush1.msra.mxu0 %v314
    %361 = vmatprep.subr.mxu0 0.0
    %362 = vmatpush1.msra.mxu0 %v315
    %363 = vmatprep.subr.mxu0 0.0
    %364 = vmatpush1.msra.mxu0 %v316
    %365 = vmatprep.subr.mxu0 0.0
    %366 = vmatpush1.msra.mxu0 %v317
    %367 = vmatprep.subr.mxu0 0.0
    %368 = vmatpush1.msra.mxu0 %v318
    %369 = vmatprep.subr.mxu0 0.0
    %370 = vmatpush1.msra.mxu0 %v319
    %371 = vmatprep.subr.mxu0 0.0
    %372 = vmatpush1.msra.mxu0 %v320
    %373 = vmatprep.subr.mxu0 0.0
    %374 = vmatpush1.msra.mxu0 %v321
    %375 = vmatprep.subr.mxu0 0.0
    %376 = vmatpush1.msra.mxu0 %v322
    %377 = vmatprep.subr.mxu0 0.0
    %378 = vmatpush1.msra.mxu0 %v323
    %379 = vmatprep.subr.mxu0 0.0
    %380 = vmatpush1.msra.mxu0 %v324
    %381 = vmatprep.subr.mxu0 0.0
    %382 = vmatpush1.msra.mxu0 %v325
    %383 = vmatprep.subr.mxu0 0.0
    %384 = vmatpush1.msra.mxu0 %v326
    %385 = vmatprep.subr.mxu0 0.0
    %386 = vmatpush1.msra.mxu0 %v327
    %387 = vmatprep.subr.mxu0 0.0
    %388 = vmatpush1.msra.mxu0 %v328
    %389 = vmatprep.subr.mxu0 0.0
    %390 = vmatpush1.msra.mxu0 %v329
    %391 = vmatprep.subr.mxu0 0.0
    %392 = vmatpush1.msra.mxu0 %v330
    %393 = vmatprep.subr.mxu0 0.0
    %394 = vmatpush1.msra.mxu0 %v331
    %395 = vmatprep.subr.mxu0 0.0
    %396 = vmatpush1.msra.mxu0 %v332
    %397 = vmatprep.mubr.f32.mxu0 %v296
    %398 = vmatmul.mubr.f32.gmra.mrb[0].mxu0 %v295
    %v399 = vpop.f32.mrb[0].mxu0
    %v400 = vadd.f32 0.0, %v399
    %v401 = vpop.f32.mrb[0].mxu0
    %402 = vmatprep.mubr.f32.mxu0 %v298
    %403 = vmatmul.mubr.f32.gmra.mrb[0].mxu0 %v297
    %v404 = vpop.f32.mrb[0].mxu0
    %v405 = vadd.f32 0.0, %v404
    %v406 = vpop.f32.mrb[0].mxu0
    %407 = vdwg.mxu0
    %v408 = vadd.f32 %v299, %v400
    %v409 = vadd.f32 %v300, %v405
    %410 = vst [vmem:[#allocation2] sm:$0xff] %v408
    %411 = vst [vmem:[#allocation2 + $0x8] sm:$0xff] %v409
    // Predicated region
    $region38: #{tpu_custom_call.1} parent=1 // pred_check
      %p412 = pneg %p62
    $region39: #{tpu_custom_call.1} parent=1 // pred_check_branch
      %414 = sbr.rel (%p412) target = $region41
    $region40: #{tpu_custom_call.1} parent=1 // pred_region
      %v415 = vld [vmem:[#allocation2] sm:$0xff]
      %v416 = vld [vmem:[#allocation2 + $0x8] sm:$0xff]
      %v417 = vld [vmem:[%s4] sm:$0x1]
      %v419 = vlaneseq
      %v420 = vshrl.u32 %v419, 7
      %v421 = vsub.s32 0, %v420
      %v422 = vrot.slane %v417, %v421
      %v424 = vadd.f32 %v415, %v422
      %v425 = vadd.f32 %v416, %v422
      %426 = vst [vmem:[#allocation9] sm:$0xff] %v424
      %427 = vst [vmem:[#allocation9 + $0x8] sm:$0xff] %v425
    $region41: #{tpu_custom_call.1} parent=1 // pred_fallthru
      _
    // Predicated region
    $region42: #{tpu_custom_call.1} parent=1 // pred_check
      _
    $region43: #{tpu_custom_call.1} parent=1 // pred_check_branch
      %429 = sbr.rel (0) target = $region45
    $region44: #{tpu_custom_call.1} parent=1 // pred_region
      %s431 = ssub.s32 256, 256
      %432 = vsyncadd [#allocation5], %s431
      %s433 = sshll.u32 [#allocation9], 4
      %s434 = int_to_ptr.vmem [resolvable:$true] %s433
      %439 = dma.vmem_to_hbm [thread:$0]  %s434, 256, %s5, [#allocation5], 128, 128, 8
    $region45: #{tpu_custom_call.1} parent=1 // pred_fallthru
      _
    // Predicated region
    $region46: #{tpu_custom_call.1} parent=1 // pred_check
      _
    $region47: #{tpu_custom_call.1} parent=1 // pred_check_branch
      %441 = sbr.rel (0) target = $region49
    $region48: #{tpu_custom_call.1} parent=1 // pred_region
      %442 = dma.done [#allocation5], 256
    $region49: #{tpu_custom_call.1} parent=1 // pred_fallthru
      _
    %443 = vsyncpa [#allocation4], 1
    %444 = vsyncpa [#allocation7], 1
    %445 = vsyncpa [#allocation5], 1

</llo_original>
